<compile_context>
chip_gen: v5e
topology: v5e:2x2
jax: 0.10.0
libtpu: 0.0.40
codegen_flags: <defaults>
</compile_context>

<pallas_src>
import math

import jax
import jax.numpy as jnp
from jax import lax
from jax.experimental import pallas as pl
from jax.experimental.pallas import tpu as pltpu

DROPOUT_P = 0.2
KEEP_SCALE = 1.0 / (1.0 - DROPOUT_P)
BN_EPS = 1e-5

# keep element iff (hash & 0x7fffffff) >= _DROP_THRESH  ->  P(keep) = 1 - p
_DROP_THRESH = int(DROPOUT_P * 2147483648.0)        # p * 2^31

# murmur3 fmix32 / golden-ratio constants reinterpreted as signed int32
_M1 = -2048144789       # 0x85EBCA6B
_M2 = -1028477387       # 0xC2B2AE35
_GOLD = -1640531527     # 0x9E3779B9


def _lshr32(v, k):
    """Logical (unsigned) right shift of int32 by a static amount k."""
    return (v >> k) & jnp.int32((1 << (32 - k)) - 1)


def _dropout_keep_mask(shape, seed):
    """Deterministic keep-mask from a per-(row, col, seed) hash.

    Depends only on element position and the seed, so every grid step (and
    every megacore shard) regenerates the exact same mask — safe under
    "parallel" column tiling.
    """
    rows = lax.broadcasted_iota(jnp.int32, shape, 0)
    cols = lax.broadcasted_iota(jnp.int32, shape, 1)
    h = rows * jnp.int32(shape[1]) + cols + seed * jnp.int32(_GOLD)
    # murmur3 fmix32 (logical shifts emulated on signed int32)
    h = h ^ _lshr32(h, 16)
    h = h * jnp.int32(_M1)
    h = h ^ _lshr32(h, 13)
    h = h * jnp.int32(_M2)
    h = h ^ _lshr32(h, 16)
    return (h & jnp.int32(0x7FFFFFFF)) >= jnp.int32(_DROP_THRESH)


def _head_kernel(seed_ref, x_ref, w_ref, gb_ref, o_ref):
    # ---- Dropout (training semantics) on the resident [B, in_feat] block ----
    x = x_ref[...]                                          # bf16
    keep = _dropout_keep_mask(x.shape, seed_ref[0])
    x = jnp.where(keep, x * jnp.asarray(KEEP_SCALE, x.dtype), jnp.zeros_like(x))

    # ---- Linear: x @ W_tile^T on the MXU (bf16 in, f32 accumulate) ----
    # Contract on both operands' last (in_feat) dim: no transposed weight copy.
    # The Linear bias is intentionally omitted (cancelled by the BN batch mean).
    fc = lax.dot_general(x, w_ref[...], (((1,), (1,)), ((), ())),
                         preferred_element_type=jnp.float32)   # [B, TN] f32

    # ---- BatchNorm1d (training): one-pass biased batch stats per feature ----
    n = jnp.float32(fc.shape[0])
    s1 = jnp.sum(fc, axis=0, keepdims=True)
    s2 = jnp.sum(fc * fc, axis=0, keepdims=True)
    mean = s1 / n
    var = s2 / n - mean * mean
    inv_std = lax.rsqrt(var + BN_EPS)

    # Fused affine: bn = fc * scale + shift   (2 VPU ops/elem on [B, TN])
    scale = gb_ref[0:1, :] * inv_std                        # gamma * inv_std
    shift = gb_ref[1:2, :] - mean * scale                   # beta - mean*scale
    o_ref[...] = (fc * scale + shift).astype(o_ref.dtype)


def reduction_drop_fc_bn_head(features, weight, bias, gamma, beta, *,
                              seed=0, col_tile=128):
    """Forward of ReductionDropFCBNHead (training mode).

    features: [B, in_feat, H, W] (NCHW); only spatial position (0, 0) is used.
    weight:   [reduction_dim, in_feat]   (PyTorch nn.Linear layout)
    bias:     [reduction_dim]            (unused: cancels under training-mode BN)
    gamma, beta: [reduction_dim]         (BatchNorm1d affine)
    Returns:  [B, reduction_dim] float32.
    """
    del bias  # exactly cancelled by the BatchNorm batch-mean subtraction
    # TODO(synk): BatchNorm running_mean/running_var updates (and eval-mode BN
    # using them) are not implemented; only the training-mode output is produced.

    x = features[..., 0, 0]                      # [B, in_feat] (free reshape for H=W=1)
    B, in_feat = x.shape
    red = weight.shape[0]

    # Feed the MXU in bf16: halves x/W HBM bytes and runs at native bf16 rate.
    # (In a real model x/W would already live in bf16; the one-time casts here
    # stand in for that.)
    x = x.astype(jnp.bfloat16)
    w = weight.astype(jnp.bfloat16)              # [red, in_feat], PyTorch layout

    gb = jnp.stack([gamma, beta], axis=0).astype(jnp.float32)    # [2, red]
    seed_arr = jnp.array([seed], dtype=jnp.int32)

    # Column tiling over reduction_dim. Tile sizes stay small enough for the
    # default scoped VMEM on v5e/v6e/v7x; x ([B, in_feat] bf16) stays resident.
    tn = col_tile if (red % col_tile == 0) else red
    grid = (red // tn,)

    grid_spec = pltpu.PrefetchScalarGridSpec(
        num_scalar_prefetch=1,                   # seed -> SMEM
        grid=grid,
        in_specs=[
            pl.BlockSpec((B, in_feat), lambda j, s: (0, 0)),     # x: resident
            pl.BlockSpec((tn, in_feat), lambda j, s: (j, 0)),    # W column tile
            pl.BlockSpec((2, tn), lambda j, s: (0, j)),          # [gamma; beta]
        ],
        out_specs=pl.BlockSpec((B, tn), lambda j, s: (0, j)),
    )

    return pl.pallas_call(
        _head_kernel,
        out_shape=jax.ShapeDtypeStruct((B, red), jnp.float32),
        grid_spec=grid_spec,
        compiler_params=pltpu.CompilerParams(
            dimension_semantics=("parallel",)),  # independent column tiles
    )(seed_arr, x, w, gb)


if __name__ == "__main__":
    # Small deterministic shapes consistent with the module:
    # features [B, in_feat, 1, 1], Linear(in_feat -> reduction_dim).
    B, IN_FEAT, RED = 8, 64, 256                 # RED=256 -> grid of 2 column tiles

    key = jax.random.PRNGKey(0)
    kx, kw, kb = jax.random.split(key, 3)

    x = jax.random.normal(kx, (B, IN_FEAT, 1, 1), dtype=jnp.float32)

    # nn.Linear default init: U(-1/sqrt(in_feat), 1/sqrt(in_feat))
    bound = 1.0 / math.sqrt(IN_FEAT)
    weight = jax.random.uniform(kw, (RED, IN_FEAT), dtype=jnp.float32,
                                minval=-bound, maxval=bound)
    bias = jax.random.uniform(kb, (RED,), dtype=jnp.float32,
                              minval=-bound, maxval=bound)

    # weights_init_kaiming for BatchNorm1d: weight=1, bias=0
    # (bn_shift=False only freezes the bias grad; the zero bias is still used)
    gamma = jnp.ones((RED,), dtype=jnp.float32)
    beta = jnp.zeros((RED,), dtype=jnp.float32)

    out = reduction_drop_fc_bn_head(x, weight, bias, gamma, beta, seed=0)
    jax.block_until_ready(out)
    assert out.shape == (B, RED) and out.dtype == jnp.float32
    assert bool(jnp.all(jnp.isfinite(out)))
    print("KERNEL_OK")
</pallas_src>

<mosaic_0001>
module attributes {stable_mosaic.version = 11 : i64} {
  func.func @_head_kernel(%arg0: i32, %arg1: memref<1xi32, #tpu.memory_space<smem>>, %arg2: memref<8x64xbf16, #tpu.memory_space<vmem>>, %arg3: memref<128x64xbf16, #tpu.memory_space<vmem>>, %arg4: memref<2x128xf32, #tpu.memory_space<vmem>>, %arg5: memref<8x128xf32, #tpu.memory_space<vmem>>) attributes {dimension_semantics = [#tpu.dimension_semantics<parallel>], iteration_bounds = array<i64: 2>, scalar_prefetch = 1 : i64, scratch_operands = 0 : i64, tpu.core_type = #tpu.core_type<tc>, window_params = [{pipeline_mode = #tpu.pipeline_mode<synchronous>, transform_indices = @transform_0, window_bounds = array<i64: 8, 64>}, {transform_indices = @transform_1, window_bounds = array<i64: 128, 64>}, {transform_indices = @transform_2, window_bounds = array<i64: 2, 128>}, {transform_indices = @transform_3, window_bounds = array<i64: 8, 128>}]} {
    %c0 = arith.constant 0 : index
    %c0_0 = arith.constant 0 : index
    %0 = vector.load %arg2[%c0, %c0_0] : memref<8x64xbf16, #tpu.memory_space<vmem>>, vector<8x64xbf16>
    %c0_1 = arith.constant 0 : index
    %1 = memref.load %arg1[%c0_1] : memref<1xi32, #tpu.memory_space<smem>>
    %2 = tpu.iota {dimensions = array<i32: 0>} : vector<8x64xi32>
    %3 = tpu.iota {dimensions = array<i32: 1>} : vector<8x64xi32>
    %c64_i32 = arith.constant 64 : i32
    %4 = vector.broadcast %c64_i32 : i32 to vector<8x64xi32>
    %5 = arith.muli %2, %4 : vector<8x64xi32>
    %6 = arith.addi %5, %3 : vector<8x64xi32>
    %c-1640531527_i32 = arith.constant -1640531527 : i32
    %7 = arith.muli %1, %c-1640531527_i32 : i32
    %8 = vector.broadcast %7 : i32 to vector<8x64xi32>
    %9 = arith.addi %6, %8 : vector<8x64xi32>
    %c16_i32 = arith.constant 16 : i32
    %10 = vector.broadcast %c16_i32 : i32 to vector<8x64xi32>
    %11 = arith.shrsi %9, %10 : vector<8x64xi32>
    %c65535_i32 = arith.constant 65535 : i32
    %12 = vector.broadcast %c65535_i32 : i32 to vector<8x64xi32>
    %13 = arith.andi %11, %12 : vector<8x64xi32>
    %14 = arith.xori %9, %13 : vector<8x64xi32>
    %c-2048144789_i32 = arith.constant -2048144789 : i32
    %15 = vector.broadcast %c-2048144789_i32 : i32 to vector<8x64xi32>
    %16 = arith.muli %14, %15 : vector<8x64xi32>
    %c13_i32 = arith.constant 13 : i32
    %17 = vector.broadcast %c13_i32 : i32 to vector<8x64xi32>
    %18 = arith.shrsi %16, %17 : vector<8x64xi32>
    %c524287_i32 = arith.constant 524287 : i32
    %19 = vector.broadcast %c524287_i32 : i32 to vector<8x64xi32>
    %20 = arith.andi %18, %19 : vector<8x64xi32>
    %21 = arith.xori %16, %20 : vector<8x64xi32>
    %c-1028477387_i32 = arith.constant -1028477387 : i32
    %22 = vector.broadcast %c-1028477387_i32 : i32 to vector<8x64xi32>
    %23 = arith.muli %21, %22 : vector<8x64xi32>
    %c16_i32_2 = arith.constant 16 : i32
    %24 = vector.broadcast %c16_i32_2 : i32 to vector<8x64xi32>
    %25 = arith.shrsi %23, %24 : vector<8x64xi32>
    %c65535_i32_3 = arith.constant 65535 : i32
    %26 = vector.broadcast %c65535_i32_3 : i32 to vector<8x64xi32>
    %27 = arith.andi %25, %26 : vector<8x64xi32>
    %28 = arith.xori %23, %27 : vector<8x64xi32>
    %c2147483647_i32 = arith.constant 2147483647 : i32
    %29 = vector.broadcast %c2147483647_i32 : i32 to vector<8x64xi32>
    %30 = arith.andi %28, %29 : vector<8x64xi32>
    %c429496729_i32 = arith.constant 429496729 : i32
    %31 = vector.broadcast %c429496729_i32 : i32 to vector<8x64xi32>
    %32 = arith.cmpi sge, %30, %31 : vector<8x64xi32>
    %cst = arith.constant 1.250000e+00 : bf16
    %33 = vector.broadcast %cst : bf16 to vector<8x64xbf16>
    %34 = arith.mulf %0, %33 : vector<8x64xbf16>
    %cst_4 = arith.constant 0.000000e+00 : bf16
    %35 = vector.broadcast %cst_4 : bf16 to vector<8x64xbf16>
    %36 = arith.select %32, %34, %35 : vector<8x64xi1>, vector<8x64xbf16>
    %c0_5 = arith.constant 0 : index
    %c0_6 = arith.constant 0 : index
    %37 = vector.load %arg3[%c0_5, %c0_6] : memref<128x64xbf16, #tpu.memory_space<vmem>>, vector<128x64xbf16>
    %cst_7 = arith.constant dense<0.000000e+00> : vector<8x128xf32>
    %38 = tpu.matmul %36, %37, %cst_7 {dimension_numbers = #tpu.dot_dimension_numbers<[1], [1], [0], [0], [0, 0, 1, 0], [], []>} : vector<8x64xbf16>, vector<128x64xbf16>, vector<8x128xf32> -> vector<8x128xf32>
    %cst_8 = arith.constant dense<0.000000e+00> : vector<128xf32>
    %39 = vector.multi_reduction <add>, %38, %cst_8 [0] : vector<8x128xf32> to vector<128xf32>
    %40 = vector.shape_cast %39 : vector<128xf32> to vector<1x128xf32>
    %41 = arith.mulf %38, %38 : vector<8x128xf32>
    %cst_9 = arith.constant dense<0.000000e+00> : vector<128xf32>
    %42 = vector.multi_reduction <add>, %41, %cst_9 [0] : vector<8x128xf32> to vector<128xf32>
    %43 = vector.shape_cast %42 : vector<128xf32> to vector<1x128xf32>
    %cst_10 = arith.constant 8.000000e+00 : f32
    %44 = vector.broadcast %cst_10 : f32 to vector<1x128xf32>
    %45 = arith.divf %40, %44 : vector<1x128xf32>
    %cst_11 = arith.constant 8.000000e+00 : f32
    %46 = vector.broadcast %cst_11 : f32 to vector<1x128xf32>
    %47 = arith.divf %43, %46 : vector<1x128xf32>
    %48 = arith.mulf %45, %45 : vector<1x128xf32>
    %49 = arith.subf %47, %48 : vector<1x128xf32>
    %cst_12 = arith.constant 9.99999974E-6 : f32
    %50 = vector.broadcast %cst_12 : f32 to vector<1x128xf32>
    %51 = arith.addf %49, %50 : vector<1x128xf32>
    %52 = math.rsqrt %51 : vector<1x128xf32>
    %c0_13 = arith.constant 0 : index
    %c0_14 = arith.constant 0 : index
    %53 = vector.load %arg4[%c0_13, %c0_14] : memref<2x128xf32, #tpu.memory_space<vmem>>, vector<1x128xf32>
    %54 = arith.mulf %53, %52 : vector<1x128xf32>
    %c1 = arith.constant 1 : index
    %c0_15 = arith.constant 0 : index
    %55 = vector.load %arg4[%c1, %c0_15] : memref<2x128xf32, #tpu.memory_space<vmem>>, vector<1x128xf32>
    %56 = arith.mulf %45, %54 : vector<1x128xf32>
    %57 = arith.subf %55, %56 : vector<1x128xf32>
    %58 = vector.broadcast %54 : vector<1x128xf32> to vector<8x128xf32>
    %59 = arith.mulf %38, %58 : vector<8x128xf32>
    %60 = vector.broadcast %57 : vector<1x128xf32> to vector<8x128xf32>
    %61 = arith.addf %59, %60 : vector<8x128xf32>
    %c0_16 = arith.constant 0 : index
    %c0_17 = arith.constant 0 : index
    %62 = vector.load %arg5[%c0_16, %c0_17] : memref<8x128xf32, #tpu.memory_space<vmem>>, vector<8x128xf32>
    tpu.vector_store %arg5[%c0_16, %c0_17], %61 {strides = array<i32>} : memref<8x128xf32, #tpu.memory_space<vmem>>, vector<8x128xf32>,
    return
  }
  func.func @transform_0(%arg0: i32, %arg1: memref<1xi32, #tpu.memory_space<smem>>) -> (i32, i32) {
    %c0_i32 = arith.constant 0 : i32
    %c0_i32_0 = arith.constant 0 : i32
    %c0_i32_1 = arith.constant 0 : i32
    return %c0_i32, %c0_i32_0 : i32, i32
  }
  func.func @transform_1(%arg0: i32, %arg1: memref<1xi32, #tpu.memory_space<smem>>) -> (i32, i32) {
    %c0_i32 = arith.constant 0 : i32
    %c0_i32_0 = arith.constant 0 : i32
    return %arg0, %c0_i32 : i32, i32
  }
  func.func @transform_2(%arg0: i32, %arg1: memref<1xi32, #tpu.memory_space<smem>>) -> (i32, i32) {
    %c0_i32 = arith.constant 0 : i32
    %c0_i32_0 = arith.constant 0 : i32
    return %c0_i32, %arg0 : i32, i32
  }
  func.func @transform_3(%arg0: i32, %arg1: memref<1xi32, #tpu.memory_space<smem>>) -> (i32, i32) {
    %c0_i32 = arith.constant 0 : i32
    %c0_i32_0 = arith.constant 0 : i32
    return %c0_i32, %arg0 : i32, i32
  }
}

</mosaic_0001>

<llo_original>
// kernel: tpu_custom_call.1
$region0: #{tpu_custom_call.1}
  #allocation0 [shape = 'u32[]', space=smem, size = 0x4, offset = 0x4, fixed_abs, tag = 'smem constant byte address 0x4 - core index']
  #allocation1 [shape = 'u32[72,128]{1,0:T(1,128)}', space=vmem, size = 0x9000, scoped, tag = 'internal scratch']
  #allocation2 [shape = 's32[1]{0}', space=sflag, size = 0x4, scoped, tag = 'scoped memory for tpu_custom_call.1']
  #allocation3 [shape = 's32[1]{0:T(128)S(6)}', space=smem, size = 0x200, scoped, tag = 'prefetched SMEM operand 0']
  %s0 = inlined_call_operand.<no memory space> [shape: s32[1], index: 0, kind: input, shape index: {}]
  %s1 = inlined_call_operand.vmem [shape: bf16[8,64], index: 1, kind: input, shape index: {}]
  %s2 = inlined_call_operand.vmem [shape: bf16[256,64], index: 2, kind: input, shape index: {}]
  %s3 = inlined_call_operand.vmem [shape: f32[2,256], index: 3, kind: input, shape index: {}]
  %s4 = inlined_call_operand.hbm [shape: f32[8,256], index: 4, kind: output, shape index: {}]
  %s5 = sld [smem:[#allocation0]]
  $region45: #{tpu_custom_call.1} parent=0
    _
  %s7 = ssub.s32 1, %s5
  %s8 = scalar_select 0, %s7, %s5
  %9 = sst [smem:[#allocation3]] %s0
  $region1: #{tpu_custom_call.1} parent=0
    #allocation4 [shape = 'u8[8192]{0}', space=vmem, size = 0x2000, scoped, tag = 'output window, operand 0']
    #allocation5 [shape = 's32[2]{0}', space=sflag, size = 0x8, scoped, tag = 'scoped memory for tpu_custom_call.1']
    %10 = vsyncpa [#allocation5], 0
    %s11 = scalar_lea.sflag [#allocation5], 1
    %12 = vsyncpa %s11, 0
    loop: start=0, step=1, limit=4
    $region2: #{tpu_custom_call.1} parent=1 // loop_pre_header
      _
    $region3: #{tpu_custom_call.1} parent=1 // loop_header
      %s14 = sphi 0, %s18
      %p15 = scmp.ge.s32.totalorder %s14, 4
      %s22 = sphi 0, %s22
      %s24 = sphi 0, %s22
      %s25 = sphi 0, %s24
      %s39 = sphi 0, %s25
      %s45 = sphi 0, %s47
      %s48 = sphi 0, %s45
      %s49 = sphi 0, %s48
      %s65 = sphi 0, %s49
      %s71 = sphi 0, %s73
      %s74 = sphi 0, %s71
      %s75 = sphi 0, %s74
      %s91 = sphi 0, %s75
      %s97 = sphi 0, %s99
      %s100 = sphi 0, %s97
      %s101 = sphi 0, %s100
      %s117 = sphi 0, %s101
    $region4: #{tpu_custom_call.1} parent=1 // loop_header_branch
      %17 = sbr.rel (%p15) target = $region8
    $region5: #{tpu_custom_call.1} parent=1 // loop_body
      %s19 = ssub.s32 %s14, 1
      %s20 = ssub.s32 %s14, 2
      %s21 = sadd.s32 %s14, 1
      %s23 = sadd.s32 %s22, 1
      %p26 = scmp.eq.s32.totalorder %s14, 1
      %p27 = scmp.ne.s32.totalorder %s22, %s24
      %p28 = scmp.eq.s32.totalorder %s14, 0
      %p29 = por %p27, %p28
      %p30 = scmp.ne.s32.totalorder %s22, %s24
      %p31 = scmp.eq.s32.totalorder %s19, 1
      %p32 = por %p30, %p31
      %p33 = scmp.ne.s32.totalorder %s24, %s25
      %p34 = scmp.eq.s32.totalorder %s19, 0
      %p35 = por %p33, %p34
      %p36 = scmp.ne.s32.totalorder %s24, %s25
      %p37 = scmp.eq.s32.totalorder %s20, 1
      %p38 = por %p36, %p37
      %p40 = scmp.ne.s32.totalorder %s25, %s39
      %p41 = scmp.eq.s32.totalorder %s20, 0
      %p42 = por %p40, %p41
      %s43 = ssub.s32 %s14, %s21
      %p44 = scmp.eq.s32.totalorder %s43, 0
      %s46 = sadd.s32 %s45, 1
      %s47 = scalar_select %p44, %s45, %s46
      %p50 = pneg %p44
      %p51 = scmp.eq.s32.totalorder %s14, 1
      %p52 = por %p50, %p51
      %p53 = scmp.ne.s32.totalorder %s45, %s48
      %p54 = scmp.eq.s32.totalorder %s14, 0
      %p55 = por %p53, %p54
      %p56 = scmp.ne.s32.totalorder %s45, %s48
      %p57 = scmp.eq.s32.totalorder %s19, 1
      %p58 = por %p56, %p57
      %p59 = scmp.ne.s32.totalorder %s48, %s49
      %p60 = scmp.eq.s32.totalorder %s19, 0
      %p61 = por %p59, %p60
      %p62 = scmp.ne.s32.totalorder %s48, %s49
      %p63 = scmp.eq.s32.totalorder %s20, 1
      %p64 = por %p62, %p63
      %p66 = scmp.ne.s32.totalorder %s49, %s65
      %p67 = scmp.eq.s32.totalorder %s20, 0
      %p68 = por %p66, %p67
      %s69 = ssub.s32 %s14, %s21
      %p70 = scmp.eq.s32.totalorder %s69, 0
      %s72 = sadd.s32 %s71, 1
      %s73 = scalar_select %p70, %s71, %s72
      %p76 = pneg %p70
      %p77 = scmp.eq.s32.totalorder %s14, 1
      %p78 = por %p76, %p77
      %p79 = scmp.ne.s32.totalorder %s71, %s74
      %p80 = scmp.eq.s32.totalorder %s14, 0
      %p81 = por %p79, %p80
      %p82 = scmp.ne.s32.totalorder %s71, %s74
      %p83 = scmp.eq.s32.totalorder %s19, 1
      %p84 = por %p82, %p83
      %p85 = scmp.ne.s32.totalorder %s74, %s75
      %p86 = scmp.eq.s32.totalorder %s19, 0
      %p87 = por %p85, %p86
      %p88 = scmp.ne.s32.totalorder %s74, %s75
      %p89 = scmp.eq.s32.totalorder %s20, 1
      %p90 = por %p88, %p89
      %p92 = scmp.ne.s32.totalorder %s75, %s91
      %p93 = scmp.eq.s32.totalorder %s20, 0
      %p94 = por %p92, %p93
      %s95 = ssub.s32 %s14, %s21
      %p96 = scmp.eq.s32.totalorder %s95, 0
      %s98 = sadd.s32 %s97, 1
      %s99 = scalar_select %p96, %s97, %s98
      %p102 = pneg %p96
      %p103 = scmp.eq.s32.totalorder %s14, 1
      %p104 = por %p102, %p103
      %p105 = scmp.ne.s32.totalorder %s97, %s100
      %p106 = scmp.eq.s32.totalorder %s14, 0
      %p107 = por %p105, %p106
      %p108 = scmp.ne.s32.totalorder %s97, %s100
      %p109 = scmp.eq.s32.totalorder %s19, 1
      %p110 = por %p108, %p109
      %p111 = scmp.ne.s32.totalorder %s100, %s101
      %p112 = scmp.eq.s32.totalorder %s19, 0
      %p113 = por %p111, %p112
      %p114 = scmp.ne.s32.totalorder %s100, %s101
      %p115 = scmp.eq.s32.totalorder %s20, 1
      %p116 = por %p114, %p115
      %p118 = scmp.ne.s32.totalorder %s101, %s117
      %p119 = scmp.eq.s32.totalorder %s20, 0
      %p120 = por %p118, %p119
      %p121 = scmp.le.s32.totalorder 1, %s14
      %p122 = scmp.lt.s32.totalorder %s14, 3
      %p123 = pnand %p121, %p122
      %p124 = pneg %p123
      // Predicated region
      $region9: #{tpu_custom_call.1} parent=5 // pred_check
        _
      $region10: #{tpu_custom_call.1} parent=5 // pred_check_branch
        %126 = sbr.rel (%p123) target = $region12
      $region11: #{tpu_custom_call.1} parent=5 // pred_region
        %s127 = ssub.s32 %s14, 1
        // Predicated region
        $region13: #{tpu_custom_call.1} parent=11 // pred_check
          %p128 = pneg %p35
        $region14: #{tpu_custom_call.1} parent=11 // pred_check_branch
          %130 = sbr.rel (%p128) target = $region16
        $region15: #{tpu_custom_call.1} parent=11 // pred_region
          _
        $region16: #{tpu_custom_call.1} parent=11 // pred_fallthru
          _
      $region12: #{tpu_custom_call.1} parent=5 // pred_fallthru
        _
      %p131 = scmp.lt.s32.totalorder %s14, 2
      // Predicated region
      $region17: #{tpu_custom_call.1} parent=5 // pred_check
        %p132 = pneg %p131
      $region18: #{tpu_custom_call.1} parent=5 // pred_check_branch
        %134 = sbr.rel (%p132) target = $region20
      $region19: #{tpu_custom_call.1} parent=5 // pred_region
        // Predicated region
        $region21: #{tpu_custom_call.1} parent=19 // pred_check
          %p135 = pneg %p55
        $region22: #{tpu_custom_call.1} parent=19 // pred_check_branch
          %137 = sbr.rel (%p135) target = $region24
        $region23: #{tpu_custom_call.1} parent=19 // pred_region
          %s138 = smul.u32 16, %s14
          %p139 = scmp.lt.s32.totalorder %s138, 31
          %s140 = scalar_select %p139, %s138, 31
          %s141 = smul.addr %s140, 4
          %s142 = scalar_lea.vmem %s2, %s141
          %s143 = smul.u32 16, %s14
        $region24: #{tpu_custom_call.1} parent=19 // pred_fallthru
          _
        // Predicated region
        $region25: #{tpu_custom_call.1} parent=19 // pred_check
          %p144 = pneg %p81
        $region26: #{tpu_custom_call.1} parent=19 // pred_check_branch
          %146 = sbr.rel (%p144) target = $region28
        $region27: #{tpu_custom_call.1} parent=19 // pred_region
          %p147 = scmp.lt.s32.totalorder %s14, 1
          %s148 = scalar_select %p147, %s14, 1
          %s149 = smul.addr %s148, 2
          %s150 = scalar_lea.vmem %s3, %s149
        $region28: #{tpu_custom_call.1} parent=19 // pred_fallthru
          _
      $region20: #{tpu_custom_call.1} parent=5 // pred_fallthru
        _
      %p151 = scmp.le.s32.totalorder 1, %s14
      %p152 = scmp.lt.s32.totalorder %s14, 3
      %p153 = pnand %p151, %p152
      %p154 = pneg %p153
      // Predicated region
      $region29: #{tpu_custom_call.1} parent=5 // pred_check
        _
      $region30: #{tpu_custom_call.1} parent=5 // pred_check_branch
        %156 = sbr.rel (%p153) target = $region32
      $region31: #{tpu_custom_call.1} parent=5 // pred_region
        %s157 = ssub.s32 %s14, 1
        %p158 = pneg %p35
        %p159 = pneg %p32
        %s160 = smul.u32 16, %s19
        %p161 = scmp.lt.s32.totalorder %s160, 31
        %s162 = scalar_select %p161, %s160, 31
        %s163 = smul.addr %s162, 4
        %s164 = scalar_lea.vmem %s2, %s163
        %p165 = pneg %p61
        %p166 = pneg %p58
        %p167 = scmp.lt.s32.totalorder %s19, 1
        %s168 = scalar_select %p167, %s19, 1
        %s169 = smul.addr %s168, 2
        %s170 = scalar_lea.vmem %s3, %s169
        %p171 = pneg %p87
        %p172 = pneg %p84
        %p173 = pneg %p113
        %p174 = pneg %p110
        %s175 = sand.u32 %s100, 1
        %s176 = scalar_lea.sflag [#allocation5], %s175
        %s177 = sand.u32 %s100, 1
        %s178 = smul.addr %s177, 8
        %s179 = scalar_lea.vmem [#allocation4], %s178
        %s180 = smul.u32 16, %s19
        %p181 = scmp.lt.s32.totalorder %s180, 31
        %s182 = scalar_select %p181, %s180, 31
        %s183 = smul.addr %s182, 4
        %s184 = scalar_lea.vmem %s2, %s183
        %s185 = smul.u32 16, %s19
        %p186 = scmp.lt.s32.totalorder %s19, 1
        %s187 = scalar_select %p186, %s19, 1
        %s188 = smul.addr %s187, 2
        %s189 = scalar_lea.vmem %s3, %s188
        %v191 = vld [vmem:[%s1] sm:$0xf]
        %s192 = sld [smem:[#allocation3]]
        %v193 = vlaneseq
        %v194 = vshrl.u32 %v193, 7
        %v195 = vlaneseq
        %v196 = vand.u32 %v195, 127
        %v197 = vmul.u32 %v194, 64
        %v198 = vadd.s32 %v197, %v196
        %s199 = smul.u32 %s192, 2654435769
        %v200 = vstv %s199
        %v201 = vadd.s32 %v198, %v200
        %v202 = vshra.s32 %v201, 16
        %v203 = vand.u32 %v202, 65535
        %v204 = vxor.u32 %v201, %v203
        %v205 = vmul.u32 %v204, 2246822507
        %v206 = vshra.s32 %v205, 13
        %v207 = vand.u32 %v206, 524287
        %v208 = vxor.u32 %v205, %v207
        %v209 = vmul.u32 %v208, 3266489909
        %v210 = vshra.s32 %v209, 16
        %v211 = vand.u32 %v210, 65535
        %v212 = vxor.u32 %v209, %v211
        %v213 = vand.u32 %v212, 2147483647
        %vm214 = vcmp.ge.s32.totalorder %v213, 429496729
        %v215 = vunpack.c.l.bf16 %v191
        %v216 = vmul.f32 %v215, 1.25
        %v217 = vpack.c.bf16 %v216, %v216
        %vm218 = vmpackc.low %vm214, %vm214
        %v219 = vsel %vm218, %v217, 0
        %v220 = vld [vmem:[%s184] sm:$0xf]
        %v221 = vld [vmem:[%s184 + $0x4] sm:$0xf]
        %v222 = vld [vmem:[%s184 + $0x8] sm:$0xf]
        %v223 = vld [vmem:[%s184 + $0xc] sm:$0xf]
        %v224 = vld [vmem:[%s184 + $0x10] sm:$0xf]
        %v225 = vld [vmem:[%s184 + $0x14] sm:$0xf]
        %v226 = vld [vmem:[%s184 + $0x18] sm:$0xf]
        %v227 = vld [vmem:[%s184 + $0x1c] sm:$0xf]
        %v228 = vld [vmem:[%s184 + $0x20] sm:$0xf]
        %v229 = vld [vmem:[%s184 + $0x24] sm:$0xf]
        %v230 = vld [vmem:[%s184 + $0x28] sm:$0xf]
        %v231 = vld [vmem:[%s184 + $0x2c] sm:$0xf]
        %v232 = vld [vmem:[%s184 + $0x30] sm:$0xf]
        %v233 = vld [vmem:[%s184 + $0x34] sm:$0xf]
        %v234 = vld [vmem:[%s184 + $0x38] sm:$0xf]
        %v235 = vld [vmem:[%s184 + $0x3c] sm:$0xf]
        %v252 = vunpack.c.l.b16 %v220
        %v253 = vunpack.c.l.b16 %v221
        %v254 = vunpack.c.l.b16 %v222
        %v255 = vunpack.c.l.b16 %v223
        %v256 = vunpack.c.l.b16 %v224
        %v257 = vunpack.c.l.b16 %v225
        %v258 = vunpack.c.l.b16 %v226
        %v259 = vunpack.c.l.b16 %v227
        %v260 = vunpack.c.l.b16 %v228
        %v261 = vunpack.c.l.b16 %v229
        %v262 = vunpack.c.l.b16 %v230
        %v263 = vunpack.c.l.b16 %v231
        %v264 = vunpack.c.l.b16 %v232
        %v265 = vunpack.c.l.b16 %v233
        %v266 = vunpack.c.l.b16 %v234
        %v267 = vunpack.c.l.b16 %v235
        %v268 = vpack.c.b16 %v253, %v252
        %v269 = vpack.c.b16 %v255, %v254
        %v270 = vpack.c.b16 %v257, %v256
        %v271 = vpack.c.b16 %v259, %v258
        %v272 = vpack.c.b16 %v261, %v260
        %v273 = vpack.c.b16 %v263, %v262
        %v274 = vpack.c.b16 %v265, %v264
        %v275 = vpack.c.b16 %v267, %v266
        %vm276 = vcmask 523264
        %v278 = vsel %vm276, %v219, 0
        %v281 = vsel %vm276, %v268, 0
        %v284 = vsel %vm276, %v269, 0
        %v287 = vsel %vm276, %v270, 0
        %v290 = vsel %vm276, %v271, 0
        %v293 = vsel %vm276, %v272, 0
        %v296 = vsel %vm276, %v273, 0
        %v299 = vsel %vm276, %v274, 0
        %v302 = vsel %vm276, %v275, 0
        %304 = vmatpush.bf16.xpose.msra.mxu0 %v302
        %305 = vmatpush.bf16.xpose.msra.mxu0 %v299
        %306 = vmatpush.bf16.xpose.msra.mxu0 %v296
        %307 = vmatpush.bf16.xpose.msra.mxu0 %v293
        %308 = vmatpush.bf16.xpose.msra.mxu0 %v290
        %309 = vmatpush.bf16.xpose.msra.mxu0 %v287
        %310 = vmatpush.bf16.xpose.msra.mxu0 %v284
        %311 = vmatpush.bf16.xpose.msra.mxu0 %v281
        %312 = vmatmul.bf16.gmra.mxu0 %v278
        %v313 = vpop.f32.mrf.mxu0
        %v314 = vadd.f32 0.0, %v313
        %v315 = vpop.f32.mrf.mxu0
        %316 = vdwg.mxu0
        %v317 = vrot.slane %v314, 4
        %v318 = vadd.f32 %v314, %v317
        %v319 = vrot.slane %v318, 2
        %v320 = vadd.f32 %v318, %v319
        %v321 = vrot.slane %v320, 1
        %v322 = vadd.f32 %v320, %v321
        %v323 = vmul.f32 %v314, %v314
        %v324 = vrot.slane %v323, 4
        %v325 = vadd.f32 %v323, %v324
        %v326 = vrot.slane %v325, 2
        %v327 = vadd.f32 %v325, %v326
        %v328 = vrot.slane %v327, 1
        %v329 = vadd.f32 %v327, %v328
        %v330 = vrcp.pop 8.0
        %v331 = vmul.f32 8.0, %v330
        %v332 = vsub.f32 1.0, %v331
        %v333 = vmul.f32 %v330, %v332
        %v334 = vadd.f32 %v330, %v333
        %vm335 = vweird.f32 %v330
        %v336 = vsel %vm335, %v330, %v334
        %v337 = vmul.f32 %v322, %v336
        %v338 = vmul.f32 %v329, %v336
        %v339 = vmul.f32 %v337, %v337
        %v340 = vsub.f32 %v338, %v339
        %v341 = vadd.f32 %v340, 1e-05
        %v342 = vrsqrt.pop %v341
        %v343 = vmul.f32 %v342, %v341
        %v344 = vmul.f32 %v343, %v342
        %v345 = vmul.f32 0.5, %v344
        %v346 = vsub.f32 1.5, %v345
        %v347 = vmul.f32 %v342, %v346
        %vm348 = vweird.f32 %v341
        %vm349 = vweird.f32 %v342
        %vm350 = vmor %vm348, %vm349
        %v351 = vsel %vm350, %v342, %v347
        %v352 = vld [vmem:[%s189] sm:$0x1]
        %v353 = vmul.f32 %v352, %v351
        %v354 = vld [vmem:[%s189 + $0x1] sm:$0x1]
        %v355 = vmul.f32 %v337, %v353
        %v356 = vsub.f32 %v354, %v355
        %v357 = vperm.slane %v353, 0
        %v358 = vmul.f32 %v314, %v357
        %v359 = vperm.slane %v356, 0
        %v360 = vadd.f32 %v358, %v359
        %361 = vst [vmem:[%s179] sm:$0xff] %v360
        %s362 = sand.u32 %s100, 1
        %s363 = scalar_lea.sflag [#allocation5], %s362
        %s364 = sand.u32 %s100, 1
        %s365 = smul.addr %s364, 8
        %s366 = scalar_lea.vmem [#allocation4], %s365
        // Predicated region
        $region33: #{tpu_custom_call.1} parent=31 // pred_check
          %p367 = pneg %p110
        $region34: #{tpu_custom_call.1} parent=31 // pred_check_branch
          %369 = sbr.rel (%p367) target = $region36
        $region35: #{tpu_custom_call.1} parent=31 // pred_region
          %371 = vsyncadd %s363, 0
          %s372 = smul.addr %s19, 8
          %s373 = scalar_lea.hbm %s4, %s372
          %s375 = sshll.u32 %s366, 4
          %s376 = int_to_ptr.vmem [resolvable:$true] %s375
          %s377 = sshll.u32 %s373, 4
          %s378 = int_to_ptr.hbm [resolvable:$true] %s377
          %380 = dma.vmem_to_hbm [thread:$0]  %s376, 128, %s378, %s363
        $region36: #{tpu_custom_call.1} parent=31 // pred_fallthru
          _
      $region32: #{tpu_custom_call.1} parent=5 // pred_fallthru
        _
      %p381 = scmp.le.s32.totalorder 2, %s14
      // Predicated region
      $region37: #{tpu_custom_call.1} parent=5 // pred_check
        %p382 = pneg %p381
      $region38: #{tpu_custom_call.1} parent=5 // pred_check_branch
        %384 = sbr.rel (%p382) target = $region40
      $region39: #{tpu_custom_call.1} parent=5 // pred_region
        %s385 = ssub.s32 %s14, 2
        // Predicated region
        $region41: #{tpu_custom_call.1} parent=39 // pred_check
          %p386 = pneg %p116
        $region42: #{tpu_custom_call.1} parent=39 // pred_check_branch
          %388 = sbr.rel (%p386) target = $region44
        $region43: #{tpu_custom_call.1} parent=39 // pred_region
          %s389 = sand.u32 %s101, 1
          %s390 = scalar_lea.sflag [#allocation5], %s389
          %s391 = sand.u32 %s101, 1
          %s392 = smul.addr %s391, 8
          %s393 = scalar_lea.vmem [#allocation4], %s392
          %395 = dma.done %s390, 128
        $region44: #{tpu_custom_call.1} parent=39 // pred_fallthru
          _
      $region40: #{tpu_custom_call.1} parent=5 // pred_fallthru
        _
    $region6: #{tpu_custom_call.1} parent=1 // loop_footer
      %s18 = sadd.s32 1, %s14
    $region7: #{tpu_custom_call.1} parent=1 // loop_footer_branch
      %13 = sbr.rel target = $region3
    $region8: #{tpu_custom_call.1} parent=1 // loop_exit
      _
    %396 = vsyncpa [#allocation5], 1
    %s397 = scalar_lea.sflag [#allocation5], 1
    %398 = vsyncpa %s397, 1

</llo_original>
